<compile_context>
chip_gen: v7x
topology: tpu7x:2x2x1
jax: 0.10.0
libtpu: 0.0.40
codegen_flags: <defaults>
</compile_context>

<pallas_src>
import functools

import jax
import jax.numpy as jnp
from jax.experimental import pallas as pl
from jax.experimental.pallas import tpu as pltpu


def _round_up(x, m):
    return ((x + m - 1) // m) * m


def _device_tuning():
    """Chip-aware knobs: activation dtype + whether to split work for 2 TensorCores."""
    try:
        kind = jax.devices()[0].device_kind.lower()
    except Exception:  # pragma: no cover
        kind = ""
    is_v5 = "v5" in kind          # v5e/v5p: no bf16 VPU/EUP -> keep SiLU in f32
    is_v7 = "v7" in kind          # v7x: 2 TensorCores per chip
    act_dtype = jnp.float32 if is_v5 else jnp.bfloat16
    return act_dtype, is_v7


def _select_tile(batch, is_v7):
    """Rows per batch tile: big tiles to amortize per-step overhead, but >=2 tiles on
    v7x (megacore) for non-trivial batches; 16-row alignment for bf16 sublane packing."""
    cap = 512 if is_v7 else 1024
    n_tiles = max(1, -(-batch // cap))
    if is_v7 and batch > 16:
        n_tiles = max(n_tiles, 2)
    return _round_up(-(-batch // n_tiles), 16)


def ode_func_kernel(xa_ref, wp_ref, fp_ref, o_ref, *,
                    shared, head_cat, p_out, in_pad, w_rows, f_rows_off, act_dtype):
    r1, r2, r3, r4 = w_rows
    rb, r_rep, r_f1row, r_red = f_rows_off

    xa = xa_ref[...]                                  # (TB, in_pad) f32, lane-dense
    x = xa.astype(jnp.bfloat16)

    b1 = fp_ref[rb + 0:rb + 1, :shared]
    b2 = fp_ref[rb + 1:rb + 2, :shared]
    b_ha = fp_ref[rb + 2:rb + 3, :head_cat]
    b_hb = fp_ref[rb + 3:rb + 4, :p_out]

    # ---- shared trunk: bf16 MXU matmuls, f32 accumulation, chip-tuned SiLU dtype.
    # (w1 was widened offline so the action / pad lanes of xa contract to zero.)
    h = jnp.dot(x, wp_ref[r1:r1 + in_pad, :shared],
                preferred_element_type=jnp.float32) + b1
    h = jax.nn.silu(h.astype(act_dtype)).astype(jnp.bfloat16)

    h = jnp.dot(h, wp_ref[r2:r2 + shared, :shared],
                preferred_element_type=jnp.float32) + b2
    h = jax.nn.silu(h.astype(act_dtype)).astype(jnp.bfloat16)

    # ---- fused head layer 1: [f1_head[0] | f2_head[0]] -> one matmul, one SiLU
    hh = jnp.dot(h, wp_ref[r3:r3 + shared, :head_cat],
                 preferred_element_type=jnp.float32) + b_ha
    hh = jax.nn.silu(hh.astype(act_dtype)).astype(jnp.bfloat16)

    # ---- fused head layer 2 (block diagonal): lanes [0,oa)=f2_flat, [oa,oa+obs)=f1, rest 0
    heads = jnp.dot(hh, wp_ref[r4:r4 + head_cat, :p_out],
                    preferred_element_type=jnp.float32) + b_hb       # f32 (TB, p_out)

    # ---- control-affine contraction, all on precomputed resident constants (no iota /
    # where / lane-concat in the kernel):
    #   mult = a replicated over the f2 lanes (via Rep2), 1 on the f1 lanes (f1_row)
    mult = jnp.dot(xa, fp_ref[r_rep:r_rep + in_pad, :p_out],
                   preferred_element_type=jnp.float32) \
        + fp_ref[r_f1row:r_f1row + 1, :p_out]
    prod = heads * mult                                              # f32, no bf16 round

    #   out_i = sum_j f2[b,i,j]*a[b,j] + f1[b,i]   via 0/1 Red matrix (f32 MXU matmul)
    o_ref[...] = jnp.dot(prod, fp_ref[r_red:r_red + p_out, :p_out],
                         preferred_element_type=jnp.float32)         # lane-dense store


def pack_params(params, obs_dim, action_dim):
    """Pack all weights/biases + the control-affine constant matrices into:
         w_pack : bf16, all learned weight matrices (heads pre-fused)
         f_pack : f32, biases + Rep2 (action replication) + f1_row + Red (group-sum)."""
    shared = params["w1"].shape[1]                        # 256
    f1n = params["wf1a"].shape[1]                         # 128
    f2n = params["wf2a"].shape[1]                         # 128
    head_cat = f1n + f2n                                  # 256
    oa = obs_dim * action_dim
    in_pad = max(128, _round_up(obs_dim + action_dim, 128))   # lane-dense input slab
    p_out = max(128, _round_up(oa + obs_dim, 128))            # lane-dense output slab
    pack_cols = max(shared, head_cat, p_out)

    # fused head layer 1: hh = silu(h @ w_ha + b_ha); hh[:, :f1n]=f1h, hh[:, f1n:]=f2h
    w_ha = jnp.concatenate([params["wf1a"], params["wf2a"]], axis=1)
    b_ha = jnp.concatenate([params["bf1a"], params["bf2a"]], axis=1)

    # fused head layer 2 (block diagonal): lanes [0,oa)=f2_flat, [oa,oa+obs)=f1
    w_hb = jnp.zeros((head_cat, p_out), jnp.float32)
    w_hb = w_hb.at[f1n:, :oa].set(params["wf2b"])
    w_hb = w_hb.at[:f1n, oa:oa + obs_dim].set(params["wf1b"])
    b_hb = jnp.zeros((1, p_out), jnp.float32)
    b_hb = b_hb.at[:, :oa].set(params["bf2b"])
    b_hb = b_hb.at[:, oa:oa + obs_dim].set(params["bf1b"])

    # w1 widened to the input slab: action / pad lanes contract to zero
    w1_ext = jnp.zeros((in_pad, shared), jnp.float32).at[:obs_dim].set(params["w1"])

    # weight pack (bf16) -- row offsets aligned to 16 sublanes for cheap static slices
    r1 = 0
    r2 = r1 + in_pad
    r3 = r2 + _round_up(shared, 16)
    r4 = r3 + _round_up(shared, 16)
    total_rows = r4 + _round_up(head_cat, 16)

    w_pack = jnp.zeros((total_rows, pack_cols), jnp.float32)
    w_pack = w_pack.at[r1:r1 + in_pad, :shared].set(w1_ext)
    w_pack = w_pack.at[r2:r2 + shared, :shared].set(params["w2"])
    w_pack = w_pack.at[r3:r3 + shared, :head_cat].set(w_ha)
    w_pack = w_pack.at[r4:r4 + head_cat, :p_out].set(w_hb)
    w_pack = w_pack.astype(jnp.bfloat16)                  # MXU-native, half the DMA bytes

    # f32 pack: biases + precomputed control-affine constants (all VMEM-resident)
    rb = 0
    r_rep = 8
    r_f1row = r_rep + in_pad
    r_red = _round_up(r_f1row + 1, 8)
    f_rows = r_red + p_out

    lane = jnp.arange(p_out)
    # Rep2[obs+j, k] = 1 iff k < oa and k % act == j   (replicates a over the f2 lanes)
    j_id = jnp.arange(in_pad)[:, None] - obs_dim
    rep2 = ((lane[None, :] < oa) & (j_id >= 0) & (j_id < action_dim)
            & ((lane[None, :] % action_dim) == j_id)).astype(jnp.float32)
    # f1_row[k] = 1 on the f1 lanes [oa, oa+obs)
    f1_row = ((lane >= oa) & (lane < oa + obs_dim)).astype(jnp.float32)
    # Red[k,i] = 1 iff (k<oa and i==k//act) or (oa<=k<oa+obs and i==k-oa)
    k_id = jnp.arange(p_out)[:, None]
    i_id = lane[None, :]
    red = (((k_id < oa) & (i_id == k_id // action_dim))
           | ((k_id >= oa) & (k_id < oa + obs_dim) & (i_id == k_id - oa))
           ).astype(jnp.float32)

    f_pack = jnp.zeros((f_rows, pack_cols), jnp.float32)
    f_pack = f_pack.at[rb + 0, :shared].set(params["b1"][0])
    f_pack = f_pack.at[rb + 1, :shared].set(params["b2"][0])
    f_pack = f_pack.at[rb + 2, :head_cat].set(b_ha[0])
    f_pack = f_pack.at[rb + 3, :p_out].set(b_hb[0])
    f_pack = f_pack.at[r_rep:r_rep + in_pad, :p_out].set(rep2)
    f_pack = f_pack.at[r_f1row, :p_out].set(f1_row)
    f_pack = f_pack.at[r_red:r_red + p_out, :p_out].set(red)

    return dict(w_pack=w_pack, f_pack=f_pack,
                w_rows=(r1, r2, r3, r4), f_rows_off=(rb, r_rep, r_f1row, r_red),
                shared=shared, head_cat=head_cat, p_out=p_out, in_pad=in_pad)


def ode_func_forward(t, x_raw, a_raw, packed, obs_dim, action_dim):
    """dx_dt = f1(x) + f2(x) @ a  (t unused, matching the PyTorch module)."""
    del t
    x = x_raw.astype(jnp.float32)
    a = a_raw.astype(jnp.float32)
    batch = x.shape[0]

    in_pad = packed["in_pad"]
    p_out = packed["p_out"]
    w_pack = packed["w_pack"]
    f_pack = packed["f_pack"]

    act_dtype, is_v7 = _device_tuning()
    tb = _select_tile(batch, is_v7)
    b_pad = _round_up(batch, tb)
    grid = (b_pad // tb,)

    # single lane-dense input slab: lanes [0,obs)=x, [obs,obs+act)=a, rest 0
    xa = jnp.zeros((b_pad, in_pad), jnp.float32)
    xa = xa.at[:batch, :obs_dim].set(x)
    xa = xa.at[:batch, obs_dim:obs_dim + action_dim].set(a)

    kernel = functools.partial(
        ode_func_kernel,
        shared=packed["shared"], head_cat=packed["head_cat"], p_out=p_out,
        in_pad=in_pad, w_rows=packed["w_rows"], f_rows_off=packed["f_rows_off"],
        act_dtype=act_dtype)

    out_pad = pl.pallas_call(
        kernel,
        out_shape=jax.ShapeDtypeStruct((b_pad, p_out), jnp.float32),
        grid_spec=pltpu.PrefetchScalarGridSpec(
            num_scalar_prefetch=0,
            grid=grid,
            in_specs=[
                pl.BlockSpec((tb, in_pad), lambda i: (i, 0)),
                # weight/const packs: index never changes -> DMA'd once, VMEM-resident
                pl.BlockSpec(w_pack.shape, lambda i: (0, 0)),
                pl.BlockSpec(f_pack.shape, lambda i: (0, 0)),
            ],
            out_specs=pl.BlockSpec((tb, p_out), lambda i: (i, 0)),
        ),
        compiler_params=pltpu.CompilerParams(
            dimension_semantics=("parallel",),      # shards batch tiles across v7x's 2 TCs
            vmem_limit_bytes=32 * 1024 * 1024,
        ),
    )(xa, w_pack, f_pack)

    return out_pad[:batch, :obs_dim]


def _init_params(key, obs_dim, action_dim):
    """Deterministic orthogonal init (std=sqrt(2)), zero biases — mirrors layer_init."""
    shared, f1h, f2h = 256, 128, 128
    ortho = jax.nn.initializers.orthogonal(scale=float(jnp.sqrt(2.0)))
    ks = jax.random.split(key, 6)

    def w(k, fan_in, fan_out):
        return ortho(k, (fan_in, fan_out), jnp.float32)

    def b(n):
        return jnp.zeros((1, n), jnp.float32)

    return dict(
        w1=w(ks[0], obs_dim, shared), b1=b(shared),
        w2=w(ks[1], shared, shared), b2=b(shared),
        wf1a=w(ks[2], shared, f1h), bf1a=b(f1h),
        wf1b=w(ks[3], f1h, obs_dim), bf1b=b(obs_dim),
        wf2a=w(ks[4], shared, f2h), bf2a=b(f2h),
        wf2b=w(ks[5], f2h, obs_dim * action_dim), bf2b=b(obs_dim * action_dim),
    )


def _reference_forward(t, x, a, params, obs_dim, action_dim):
    """Pure-JAX f32 reference, mirrors the PyTorch module exactly."""
    del t
    x = x.astype(jnp.float32)
    a = a.astype(jnp.float32)
    h = jax.nn.silu(x @ params["w1"] + params["b1"])
    h = jax.nn.silu(h @ params["w2"] + params["b2"])
    f1 = jax.nn.silu(h @ params["wf1a"] + params["bf1a"]) @ params["wf1b"] + params["bf1b"]
    f2_flat = jax.nn.silu(h @ params["wf2a"] + params["bf2a"]) @ params["wf2b"] + params["bf2b"]
    f2 = f2_flat.reshape(-1, obs_dim, action_dim)
    control = jnp.einsum("bij,bj->bi", f2, a)
    return f1 + control


if __name__ == "__main__":
    obs_dim, action_dim, batch = 16, 4, 8

    key = jax.random.PRNGKey(0)
    kp, kx, ka = jax.random.split(key, 3)
    params = _init_params(kp, obs_dim, action_dim)
    packed = pack_params(params, obs_dim, action_dim)   # pack once; reuse across calls

    x_raw = jax.random.normal(kx, (batch, obs_dim), jnp.float32)
    a_raw = jax.random.normal(ka, (batch, action_dim), jnp.float32)
    t = jnp.float32(0.0)

    dx_dt = ode_func_forward(t, x_raw, a_raw, packed, obs_dim, action_dim)
    dx_dt = jax.block_until_ready(dx_dt)

    ref = _reference_forward(t, x_raw, a_raw, params, obs_dim, action_dim)
    assert dx_dt.shape == (batch, obs_dim)
    # bf16 matmuls / activations (f32 accumulation) vs pure-f32 reference.
    assert jnp.allclose(dx_dt, ref, atol=5e-2, rtol=5e-2), (
        f"mismatch vs reference: max abs diff = {jnp.max(jnp.abs(dx_dt - ref))}")

    print("KERNEL_OK")
</pallas_src>

<mosaic_0001>
module attributes {stable_mosaic.version = 11 : i64} {
  func.func @ode_func_kernel(%arg0: i32, %arg1: memref<16x128xf32, #tpu.memory_space<vmem>>, %arg2: memref<896x256xbf16, #tpu.memory_space<vmem>>, %arg3: memref<272x256xf32, #tpu.memory_space<vmem>>, %arg4: memref<16x128xf32, #tpu.memory_space<vmem>>) attributes {dimension_semantics = [#tpu.dimension_semantics<parallel>], iteration_bounds = array<i64: 1>, scalar_prefetch = 0 : i64, scratch_operands = 0 : i64, tpu.core_type = #tpu.core_type<tc>, window_params = [{transform_indices = @transform_0, window_bounds = array<i64: 16, 128>}, {pipeline_mode = #tpu.pipeline_mode<synchronous>, transform_indices = @transform_1, window_bounds = array<i64: 896, 256>}, {pipeline_mode = #tpu.pipeline_mode<synchronous>, transform_indices = @transform_2, window_bounds = array<i64: 272, 256>}, {transform_indices = @transform_3, window_bounds = array<i64: 16, 128>}]} {
    %c0 = arith.constant 0 : index
    %c0_0 = arith.constant 0 : index
    %0 = vector.load %arg1[%c0, %c0_0] : memref<16x128xf32, #tpu.memory_space<vmem>>, vector<16x128xf32>
    %1 = arith.truncf %0 : vector<16x128xf32> to vector<16x128xbf16>
    %c0_1 = arith.constant 0 : index
    %c0_2 = arith.constant 0 : index
    %2 = vector.load %arg3[%c0_1, %c0_2] : memref<272x256xf32, #tpu.memory_space<vmem>>, vector<1x256xf32>
    %c1 = arith.constant 1 : index
    %c0_3 = arith.constant 0 : index
    %3 = vector.load %arg3[%c1, %c0_3] : memref<272x256xf32, #tpu.memory_space<vmem>>, vector<1x256xf32>
    %c2 = arith.constant 2 : index
    %c0_4 = arith.constant 0 : index
    %4 = vector.load %arg3[%c2, %c0_4] : memref<272x256xf32, #tpu.memory_space<vmem>>, vector<1x256xf32>
    %c3 = arith.constant 3 : index
    %c0_5 = arith.constant 0 : index
    %5 = vector.load %arg3[%c3, %c0_5] : memref<272x256xf32, #tpu.memory_space<vmem>>, vector<1x128xf32>
    %c0_6 = arith.constant 0 : index
    %c0_7 = arith.constant 0 : index
    %6 = vector.load %arg2[%c0_6, %c0_7] : memref<896x256xbf16, #tpu.memory_space<vmem>>, vector<128x256xbf16>
    %cst = arith.constant dense<0.000000e+00> : vector<16x256xf32>
    %7 = tpu.matmul %1, %6, %cst {dimension_numbers = #tpu.dot_dimension_numbers<[1], [0], [0], [1], [0, 0, 1, 1], [], []>} : vector<16x128xbf16>, vector<128x256xbf16>, vector<16x256xf32> -> vector<16x256xf32>
    %8 = vector.broadcast %2 : vector<1x256xf32> to vector<16x256xf32>
    %9 = arith.addf %7, %8 : vector<16x256xf32>
    %10 = arith.truncf %9 : vector<16x256xf32> to vector<16x256xbf16>
    %11 = arith.negf %10 : vector<16x256xbf16>
    %12 = math.exp %11 : vector<16x256xbf16>
    %cst_8 = arith.constant 1.000000e+00 : bf16
    %13 = vector.broadcast %cst_8 : bf16 to vector<16x256xbf16>
    %14 = arith.addf %13, %12 : vector<16x256xbf16>
    %15 = arith.divf %13, %14 : vector<16x256xbf16>
    %16 = arith.mulf %10, %15 : vector<16x256xbf16>
    %c128 = arith.constant 128 : index
    %c0_9 = arith.constant 0 : index
    %17 = vector.load %arg2[%c128, %c0_9] : memref<896x256xbf16, #tpu.memory_space<vmem>>, vector<256x256xbf16>
    %cst_10 = arith.constant dense<0.000000e+00> : vector<16x256xf32>
    %18 = tpu.matmul %16, %17, %cst_10 {dimension_numbers = #tpu.dot_dimension_numbers<[1], [0], [0], [1], [0, 0, 1, 1], [], []>} : vector<16x256xbf16>, vector<256x256xbf16>, vector<16x256xf32> -> vector<16x256xf32>
    %19 = vector.broadcast %3 : vector<1x256xf32> to vector<16x256xf32>
    %20 = arith.addf %18, %19 : vector<16x256xf32>
    %21 = arith.truncf %20 : vector<16x256xf32> to vector<16x256xbf16>
    %22 = arith.negf %21 : vector<16x256xbf16>
    %23 = math.exp %22 : vector<16x256xbf16>
    %cst_11 = arith.constant 1.000000e+00 : bf16
    %24 = vector.broadcast %cst_11 : bf16 to vector<16x256xbf16>
    %25 = arith.addf %24, %23 : vector<16x256xbf16>
    %26 = arith.divf %24, %25 : vector<16x256xbf16>
    %27 = arith.mulf %21, %26 : vector<16x256xbf16>
    %c384 = arith.constant 384 : index
    %c0_12 = arith.constant 0 : index
    %28 = vector.load %arg2[%c384, %c0_12] : memref<896x256xbf16, #tpu.memory_space<vmem>>, vector<256x256xbf16>
    %cst_13 = arith.constant dense<0.000000e+00> : vector<16x256xf32>
    %29 = tpu.matmul %27, %28, %cst_13 {dimension_numbers = #tpu.dot_dimension_numbers<[1], [0], [0], [1], [0, 0, 1, 1], [], []>} : vector<16x256xbf16>, vector<256x256xbf16>, vector<16x256xf32> -> vector<16x256xf32>
    %30 = vector.broadcast %4 : vector<1x256xf32> to vector<16x256xf32>
    %31 = arith.addf %29, %30 : vector<16x256xf32>
    %32 = arith.truncf %31 : vector<16x256xf32> to vector<16x256xbf16>
    %33 = arith.negf %32 : vector<16x256xbf16>
    %34 = math.exp %33 : vector<16x256xbf16>
    %cst_14 = arith.constant 1.000000e+00 : bf16
    %35 = vector.broadcast %cst_14 : bf16 to vector<16x256xbf16>
    %36 = arith.addf %35, %34 : vector<16x256xbf16>
    %37 = arith.divf %35, %36 : vector<16x256xbf16>
    %38 = arith.mulf %32, %37 : vector<16x256xbf16>
    %c640 = arith.constant 640 : index
    %c0_15 = arith.constant 0 : index
    %39 = vector.load %arg2[%c640, %c0_15] : memref<896x256xbf16, #tpu.memory_space<vmem>>, vector<256x128xbf16>
    %cst_16 = arith.constant dense<0.000000e+00> : vector<16x128xf32>
    %40 = tpu.matmul %38, %39, %cst_16 {dimension_numbers = #tpu.dot_dimension_numbers<[1], [0], [0], [1], [0, 0, 1, 1], [], []>} : vector<16x256xbf16>, vector<256x128xbf16>, vector<16x128xf32> -> vector<16x128xf32>
    %41 = vector.broadcast %5 : vector<1x128xf32> to vector<16x128xf32>
    %42 = arith.addf %40, %41 : vector<16x128xf32>
    %c8 = arith.constant 8 : index
    %c0_17 = arith.constant 0 : index
    %43 = vector.load %arg3[%c8, %c0_17] : memref<272x256xf32, #tpu.memory_space<vmem>>, vector<128x128xf32>
    %cst_18 = arith.constant dense<0.000000e+00> : vector<16x128xf32>
    %44 = tpu.matmul %0, %43, %cst_18 {dimension_numbers = #tpu.dot_dimension_numbers<[1], [0], [0], [1], [0, 0, 1, 1], [], []>} : vector<16x128xf32>, vector<128x128xf32>, vector<16x128xf32> -> vector<16x128xf32>
    %c136 = arith.constant 136 : index
    %c0_19 = arith.constant 0 : index
    %45 = vector.load %arg3[%c136, %c0_19] : memref<272x256xf32, #tpu.memory_space<vmem>>, vector<1x128xf32>
    %46 = vector.broadcast %45 : vector<1x128xf32> to vector<16x128xf32>
    %47 = arith.addf %44, %46 : vector<16x128xf32>
    %48 = arith.mulf %42, %47 : vector<16x128xf32>
    %c144 = arith.constant 144 : index
    %c0_20 = arith.constant 0 : index
    %49 = vector.load %arg3[%c144, %c0_20] : memref<272x256xf32, #tpu.memory_space<vmem>>, vector<128x128xf32>
    %cst_21 = arith.constant dense<0.000000e+00> : vector<16x128xf32>
    %50 = tpu.matmul %48, %49, %cst_21 {dimension_numbers = #tpu.dot_dimension_numbers<[1], [0], [0], [1], [0, 0, 1, 1], [], []>} : vector<16x128xf32>, vector<128x128xf32>, vector<16x128xf32> -> vector<16x128xf32>
    %c0_22 = arith.constant 0 : index
    %c0_23 = arith.constant 0 : index
    %51 = vector.load %arg4[%c0_22, %c0_23] : memref<16x128xf32, #tpu.memory_space<vmem>>, vector<16x128xf32>
    tpu.vector_store %arg4[%c0_22, %c0_23], %50 {strides = array<i32>} : memref<16x128xf32, #tpu.memory_space<vmem>>, vector<16x128xf32>,
    return
  }
  func.func @transform_0(%arg0: i32) -> (i32, i32) {
    %c0_i32 = arith.constant 0 : i32
    %c0_i32_0 = arith.constant 0 : i32
    return %arg0, %c0_i32 : i32, i32
  }
  func.func @transform_1(%arg0: i32) -> (i32, i32) {
    %c0_i32 = arith.constant 0 : i32
    %c0_i32_0 = arith.constant 0 : i32
    %c0_i32_1 = arith.constant 0 : i32
    return %c0_i32, %c0_i32_0 : i32, i32
  }
  func.func @transform_2(%arg0: i32) -> (i32, i32) {
    %c0_i32 = arith.constant 0 : i32
    %c0_i32_0 = arith.constant 0 : i32
    %c0_i32_1 = arith.constant 0 : i32
    return %c0_i32, %c0_i32_0 : i32, i32
  }
  func.func @transform_3(%arg0: i32) -> (i32, i32) {
    %c0_i32 = arith.constant 0 : i32
    %c0_i32_0 = arith.constant 0 : i32
    return %arg0, %c0_i32 : i32, i32
  }
}

</mosaic_0001>

<llo_original>
// kernel: tpu_custom_call.1
$region0: #{tpu_custom_call.1}
  #allocation0 [shape = 'u32[]', space=smem, size = 0x4, offset = 0x4, fixed_abs, tag = 'smem constant byte address 0x4 - core index']
  #allocation1 [shape = 'u32[144,128]{1,0:T(1,128)}', space=vmem, size = 0x12000, scoped, tag = 'internal scratch']
  %s0 = inlined_call_operand.hbm [shape: f32[16,128], index: 0, kind: input, shape index: {}]
  %s1 = inlined_call_operand.hbm [shape: bf16[896,256], index: 1, kind: input, shape index: {}]
  %s2 = inlined_call_operand.hbm [shape: f32[272,256], index: 2, kind: input, shape index: {}]
  %s3 = inlined_call_operand.hbm [shape: f32[16,128], index: 3, kind: output, shape index: {}]
  %s4 = sld [smem:[#allocation0]]
  $region34: #{tpu_custom_call.1} parent=0
    _
  %s6 = ssub.s32 1, %s4
  %s7 = scalar_select 0, %s6, %s4
  $region1: #{tpu_custom_call.1} parent=0
    #allocation2 [shape = 'u8[8192]{0}', space=vmem, size = 0x2000, scoped, tag = 'input window, operand 0, single buffered']
    #allocation3 [shape = 's32[1]{0}', space=sflag, size = 0x4, scoped, tag = 'scoped memory for tpu_custom_call.1']
    #allocation4 [shape = 's32[1]{0}', space=sflag, size = 0x4, scoped, tag = 'scoped memory for tpu_custom_call.1']
    #allocation5 [shape = 'u8[458752]{0}', space=vmem, size = 0x70000, scoped, tag = 'input window, operand 1, single buffered']
    #allocation6 [shape = 's32[1]{0}', space=sflag, size = 0x4, scoped, tag = 'scoped memory for tpu_custom_call.1']
    #allocation7 [shape = 'u8[278528]{0}', space=vmem, size = 0x44000, scoped, tag = 'input window, operand 2, single buffered']
    #allocation8 [shape = 'u8[8192]{0}', space=vmem, size = 0x2000, scoped, tag = 'output window, operand 0, single buffered']
    %8 = vsyncpa [#allocation3], 0
    %9 = vsyncpa [#allocation6], 0
    %10 = vsyncpa [#allocation4], 0
    // Predicated region
    $region2: #{tpu_custom_call.1} parent=1 // pred_check
      _
    $region3: #{tpu_custom_call.1} parent=1 // pred_check_branch
      %12 = sbr.rel (0) target = $region5
    $region4: #{tpu_custom_call.1} parent=1 // pred_region
      %s14 = ssub.s32 256, 256
      %15 = vsyncadd [#allocation3], %s14
      %s16 = sshll.u32 [#allocation2], 4
      %s17 = int_to_ptr.vmem [resolvable:$true] %s16
      %22 = dma.hbm_to_vmem [thread:$0]  %s0, 256, %s17, [#allocation3], 128, 128, 8
    $region5: #{tpu_custom_call.1} parent=1 // pred_fallthru
      _
    // Predicated region
    $region6: #{tpu_custom_call.1} parent=1 // pred_check
      _
    $region7: #{tpu_custom_call.1} parent=1 // pred_check_branch
      %24 = sbr.rel (0) target = $region9
    $region8: #{tpu_custom_call.1} parent=1 // pred_region
      %s26 = ssub.s32 14336, 14336
      %27 = vsyncadd [#allocation6], %s26
      %s28 = sshll.u32 [#allocation5], 4
      %s29 = int_to_ptr.vmem [resolvable:$true] %s28
      %34 = dma.hbm_to_vmem [thread:$0]  %s1, 14336, %s29, [#allocation6], 128, 128, 8
    $region9: #{tpu_custom_call.1} parent=1 // pred_fallthru
      _
    // Predicated region
    $region10: #{tpu_custom_call.1} parent=1 // pred_check
      _
    $region11: #{tpu_custom_call.1} parent=1 // pred_check_branch
      %36 = sbr.rel (0) target = $region13
    $region12: #{tpu_custom_call.1} parent=1 // pred_region
      %s38 = ssub.s32 8704, 8704
      %39 = vsyncadd [#allocation6], %s38
      %s40 = sshll.u32 [#allocation7], 4
      %s41 = int_to_ptr.vmem [resolvable:$true] %s40
      %46 = dma.hbm_to_vmem [thread:$0]  %s2, 8704, %s41, [#allocation6], 256, 256, 16
    $region13: #{tpu_custom_call.1} parent=1 // pred_fallthru
      _
    // Predicated region
    $region14: #{tpu_custom_call.1} parent=1 // pred_check
      _
    $region15: #{tpu_custom_call.1} parent=1 // pred_check_branch
      %48 = sbr.rel (0) target = $region17
    $region16: #{tpu_custom_call.1} parent=1 // pred_region
      %49 = dma.done [#allocation3], 256
    $region17: #{tpu_custom_call.1} parent=1 // pred_fallthru
      _
    // Predicated region
    $region18: #{tpu_custom_call.1} parent=1 // pred_check
      _
    $region19: #{tpu_custom_call.1} parent=1 // pred_check_branch
      %51 = sbr.rel (0) target = $region21
    $region20: #{tpu_custom_call.1} parent=1 // pred_region
      %52 = dma.done [#allocation6], 14336
    $region21: #{tpu_custom_call.1} parent=1 // pred_fallthru
      _
    // Predicated region
    $region22: #{tpu_custom_call.1} parent=1 // pred_check
      _
    $region23: #{tpu_custom_call.1} parent=1 // pred_check_branch
      %54 = sbr.rel (0) target = $region25
    $region24: #{tpu_custom_call.1} parent=1 // pred_region
      %55 = dma.done [#allocation6], 8704
    $region25: #{tpu_custom_call.1} parent=1 // pred_fallthru
      _
    %v58 = vld [vmem:[#allocation2] sm:$0xff]
    %v59 = vld [vmem:[#allocation2 + $0x8] sm:$0xff]
    %v60 = vpack.c.bf16 %v59, %v58
    %v61 = vld [vmem:[#allocation7] ss:$8 sm:$0x3]
    %s62 = scalar_lea.vmem [#allocation7], 1
    %v63 = vld [vmem:[%s62] ss:$8 sm:$0x3]
    %s64 = scalar_lea.vmem [#allocation7], 2
    %v65 = vld [vmem:[%s64] ss:$8 sm:$0x3]
    %v66 = vld [vmem:[#allocation7 + $0x3] ss:$0 sm:$0xff]
    %v67 = vld [vmem:[#allocation5] sm:$0xff]
    %v68 = vld [vmem:[#allocation5 + $0x8] sm:$0xff]
    %v69 = vld [vmem:[#allocation5 + $0x10] sm:$0xff]
    %v70 = vld [vmem:[#allocation5 + $0x18] sm:$0xff]
    %v71 = vld [vmem:[#allocation5 + $0x20] sm:$0xff]
    %v72 = vld [vmem:[#allocation5 + $0x28] sm:$0xff]
    %v73 = vld [vmem:[#allocation5 + $0x30] sm:$0xff]
    %v74 = vld [vmem:[#allocation5 + $0x38] sm:$0xff]
    %v75 = vld [vmem:[#allocation5 + $0x40] sm:$0xff]
    %v76 = vld [vmem:[#allocation5 + $0x48] sm:$0xff]
    %v77 = vld [vmem:[#allocation5 + $0x50] sm:$0xff]
    %v78 = vld [vmem:[#allocation5 + $0x58] sm:$0xff]
    %v79 = vld [vmem:[#allocation5 + $0x60] sm:$0xff]
    %v80 = vld [vmem:[#allocation5 + $0x68] sm:$0xff]
    %v81 = vld [vmem:[#allocation5 + $0x70] sm:$0xff]
    %v82 = vld [vmem:[#allocation5 + $0x78] sm:$0xff]
    %v84 = vlaneseq
    %v85 = vshrl.u32 %v84, 7
    %v86 = vsub.s32 0, %v85
    %v87 = vrot.slane %v61, %v86
    %v88 = vlaneseq
    %v89 = vshrl.u32 %v88, 7
    %v90 = vsub.s32 1, %v89
    %v91 = vrot.slane %v61, %v90
    %v110 = vunpack.c.l.b16 %v67
    %v111 = vunpack.c.h.b16 %v67
    %v112 = vunpack.c.l.b16 %v68
    %v113 = vunpack.c.h.b16 %v68
    %v114 = vunpack.c.l.b16 %v69
    %v115 = vunpack.c.h.b16 %v69
    %v116 = vunpack.c.l.b16 %v70
    %v117 = vunpack.c.h.b16 %v70
    %v118 = vunpack.c.l.b16 %v71
    %v119 = vunpack.c.h.b16 %v71
    %v120 = vunpack.c.l.b16 %v72
    %v121 = vunpack.c.h.b16 %v72
    %v122 = vunpack.c.l.b16 %v73
    %v123 = vunpack.c.h.b16 %v73
    %v124 = vunpack.c.l.b16 %v74
    %v125 = vunpack.c.h.b16 %v74
    %v126 = vunpack.c.l.b16 %v75
    %v127 = vunpack.c.h.b16 %v75
    %v128 = vunpack.c.l.b16 %v76
    %v129 = vunpack.c.h.b16 %v76
    %v130 = vunpack.c.l.b16 %v77
    %v131 = vunpack.c.h.b16 %v77
    %v132 = vunpack.c.l.b16 %v78
    %v133 = vunpack.c.h.b16 %v78
    %v134 = vunpack.c.l.b16 %v79
    %v135 = vunpack.c.h.b16 %v79
    %v136 = vunpack.c.l.b16 %v80
    %v137 = vunpack.c.h.b16 %v80
    %v138 = vunpack.c.l.b16 %v81
    %v139 = vunpack.c.h.b16 %v81
    %v140 = vunpack.c.l.b16 %v82
    %v141 = vunpack.c.h.b16 %v82
    %v142 = vpack.c.b16 %v112, %v110
    %v143 = vpack.c.b16 %v113, %v111
    %v144 = vpack.c.b16 %v116, %v114
    %v145 = vpack.c.b16 %v117, %v115
    %v146 = vpack.c.b16 %v120, %v118
    %v147 = vpack.c.b16 %v121, %v119
    %v148 = vpack.c.b16 %v124, %v122
    %v149 = vpack.c.b16 %v125, %v123
    %v150 = vpack.c.b16 %v128, %v126
    %v151 = vpack.c.b16 %v129, %v127
    %v152 = vpack.c.b16 %v132, %v130
    %v153 = vpack.c.b16 %v133, %v131
    %v154 = vpack.c.b16 %v136, %v134
    %v155 = vpack.c.b16 %v137, %v135
    %v156 = vpack.c.b16 %v140, %v138
    %v157 = vpack.c.b16 %v141, %v139
    %174 = vmatprep.subr.bf16.mxu0 %v143
    %175 = vmatpush1.bf16.msra.mxu0 %v142
    %176 = vmatprep.subr.bf16.mxu0 %v145
    %177 = vmatpush1.bf16.msra.mxu0 %v144
    %178 = vmatprep.subr.bf16.mxu0 %v147
    %179 = vmatpush1.bf16.msra.mxu0 %v146
    %180 = vmatprep.subr.bf16.mxu0 %v149
    %181 = vmatpush1.bf16.msra.mxu0 %v148
    %182 = vmatprep.subr.bf16.mxu0 %v151
    %183 = vmatpush1.bf16.msra.mxu0 %v150
    %184 = vmatprep.subr.bf16.mxu0 %v153
    %185 = vmatpush1.bf16.msra.mxu0 %v152
    %186 = vmatprep.subr.bf16.mxu0 %v155
    %187 = vmatpush1.bf16.msra.mxu0 %v154
    %188 = vmatprep.subr.bf16.mxu0 %v157
    %189 = vmatpush1.bf16.msra.mxu0 %v156
    %190 = vmatprep.subr.bf16.mxu0 0
    %191 = vmatpush1.bf16.msra.mxu0 0
    %192 = vmatprep.subr.bf16.mxu0 0
    %193 = vmatpush1.bf16.msra.mxu0 0
    %194 = vmatprep.subr.bf16.mxu0 0
    %195 = vmatpush1.bf16.msra.mxu0 0
    %196 = vmatprep.subr.bf16.mxu0 0
    %197 = vmatpush1.bf16.msra.mxu0 0
    %198 = vmatprep.subr.bf16.mxu0 0
    %199 = vmatpush1.bf16.msra.mxu0 0
    %200 = vmatprep.subr.bf16.mxu0 0
    %201 = vmatpush1.bf16.msra.mxu0 0
    %202 = vmatprep.subr.bf16.mxu0 0
    %203 = vmatpush1.bf16.msra.mxu0 0
    %204 = vmatprep.subr.bf16.mxu0 0
    %205 = vmatpush1.bf16.msra.mxu0 0
    %206 = vmatprep.mubr.bf16.mxu0 0
    %207 = vmatmul.mubr.bf16.gmra.mrb[0].mxu0 %v60
    %v208 = vpop.f32.mrb[0].mxu0
    %v209 = vadd.f32 %v87, %v208
    %v210 = vpop.f32.mrb[0].mxu0
    %v211 = vadd.f32 %v91, %v210
    %v212 = vpop.f32.mrb[0].mxu0
    %v213 = vadd.f32 %v87, %v212
    %v214 = vpop.f32.mrb[0].mxu0
    %v215 = vadd.f32 %v91, %v214
    %216 = vdwg.mxu0
    %v217 = vpack.c.bf16 %v213, %v209
    %v218 = vpack.c.bf16 %v215, %v211
    %v219 = vxor.u32 %v217, 2147516416
    %v220 = vxor.u32 %v218, 2147516416
    %v222 = vmul.bf16 %v219, 1069105081
    %v223 = vpow.bf16.pop %v222
    %v225 = vmul.bf16 %v220, 1069105081
    %v226 = vpow.bf16.pop %v225
    %v227 = vadd.bf16 %v223, 1065369472
    %v228 = vadd.bf16 %v226, 1065369472
    %v229 = vrcp.bf16.pop %v227
    %v230 = vmul.bf16 1065369472, %v229
    %v231 = vrcp.bf16.pop %v228
    %v232 = vmul.bf16 1065369472, %v231
    %v233 = vmul.bf16 %v217, %v230
    %v234 = vmul.bf16 %v218, %v232
    %v235 = vld [vmem:[#allocation5 + $0x80] sm:$0xff]
    %v236 = vld [vmem:[#allocation5 + $0x88] sm:$0xff]
    %v237 = vld [vmem:[#allocation5 + $0x90] sm:$0xff]
    %v238 = vld [vmem:[#allocation5 + $0x98] sm:$0xff]
    %v239 = vld [vmem:[#allocation5 + $0xa0] sm:$0xff]
    %v240 = vld [vmem:[#allocation5 + $0xa8] sm:$0xff]
    %v241 = vld [vmem:[#allocation5 + $0xb0] sm:$0xff]
    %v242 = vld [vmem:[#allocation5 + $0xb8] sm:$0xff]
    %v243 = vld [vmem:[#allocation5 + $0xc0] sm:$0xff]
    %v244 = vld [vmem:[#allocation5 + $0xc8] sm:$0xff]
    %v245 = vld [vmem:[#allocation5 + $0xd0] sm:$0xff]
    %v246 = vld [vmem:[#allocation5 + $0xd8] sm:$0xff]
    %v247 = vld [vmem:[#allocation5 + $0xe0] sm:$0xff]
    %v248 = vld [vmem:[#allocation5 + $0xe8] sm:$0xff]
    %v249 = vld [vmem:[#allocation5 + $0xf0] sm:$0xff]
    %v250 = vld [vmem:[#allocation5 + $0xf8] sm:$0xff]
    %v251 = vld [vmem:[#allocation5 + $0x100] sm:$0xff]
    %v252 = vld [vmem:[#allocation5 + $0x108] sm:$0xff]
    %v253 = vld [vmem:[#allocation5 + $0x110] sm:$0xff]
    %v254 = vld [vmem:[#allocation5 + $0x118] sm:$0xff]
    %v255 = vld [vmem:[#allocation5 + $0x120] sm:$0xff]
    %v256 = vld [vmem:[#allocation5 + $0x128] sm:$0xff]
    %v257 = vld [vmem:[#allocation5 + $0x130] sm:$0xff]
    %v258 = vld [vmem:[#allocation5 + $0x138] sm:$0xff]
    %v259 = vld [vmem:[#allocation5 + $0x140] sm:$0xff]
    %v260 = vld [vmem:[#allocation5 + $0x148] sm:$0xff]
    %v261 = vld [vmem:[#allocation5 + $0x150] sm:$0xff]
    %v262 = vld [vmem:[#allocation5 + $0x158] sm:$0xff]
    %v263 = vld [vmem:[#allocation5 + $0x160] sm:$0xff]
    %v264 = vld [vmem:[#allocation5 + $0x168] sm:$0xff]
    %v265 = vld [vmem:[#allocation5 + $0x170] sm:$0xff]
    %v266 = vld [vmem:[#allocation5 + $0x178] sm:$0xff]
    %v268 = vlaneseq
    %v269 = vshrl.u32 %v268, 7
    %v270 = vsub.s32 0, %v269
    %v271 = vrot.slane %v63, %v270
    %v272 = vlaneseq
    %v273 = vshrl.u32 %v272, 7
    %v274 = vsub.s32 1, %v273
    %v275 = vrot.slane %v63, %v274
    %v310 = vunpack.c.l.b16 %v235
    %v311 = vunpack.c.h.b16 %v235
    %v312 = vunpack.c.l.b16 %v236
    %v313 = vunpack.c.h.b16 %v236
    %v314 = vunpack.c.l.b16 %v237
    %v315 = vunpack.c.h.b16 %v237
    %v316 = vunpack.c.l.b16 %v238
    %v317 = vunpack.c.h.b16 %v238
    %v318 = vunpack.c.l.b16 %v239
    %v319 = vunpack.c.h.b16 %v239
    %v320 = vunpack.c.l.b16 %v240
    %v321 = vunpack.c.h.b16 %v240
    %v322 = vunpack.c.l.b16 %v241
    %v323 = vunpack.c.h.b16 %v241
    %v324 = vunpack.c.l.b16 %v242
    %v325 = vunpack.c.h.b16 %v242
    %v326 = vunpack.c.l.b16 %v243
    %v327 = vunpack.c.h.b16 %v243
    %v328 = vunpack.c.l.b16 %v244
    %v329 = vunpack.c.h.b16 %v244
    %v330 = vunpack.c.l.b16 %v245
    %v331 = vunpack.c.h.b16 %v245
    %v332 = vunpack.c.l.b16 %v246
    %v333 = vunpack.c.h.b16 %v246
    %v334 = vunpack.c.l.b16 %v247
    %v335 = vunpack.c.h.b16 %v247
    %v336 = vunpack.c.l.b16 %v248
    %v337 = vunpack.c.h.b16 %v248
    %v338 = vunpack.c.l.b16 %v249
    %v339 = vunpack.c.h.b16 %v249
    %v340 = vunpack.c.l.b16 %v250
    %v341 = vunpack.c.h.b16 %v250
    %v342 = vunpack.c.l.b16 %v251
    %v343 = vunpack.c.h.b16 %v251
    %v344 = vunpack.c.l.b16 %v252
    %v345 = vunpack.c.h.b16 %v252
    %v346 = vunpack.c.l.b16 %v253
    %v347 = vunpack.c.h.b16 %v253
    %v348 = vunpack.c.l.b16 %v254
    %v349 = vunpack.c.h.b16 %v254
    %v350 = vunpack.c.l.b16 %v255
    %v351 = vunpack.c.h.b16 %v255
    %v352 = vunpack.c.l.b16 %v256
    %v353 = vunpack.c.h.b16 %v256
    %v354 = vunpack.c.l.b16 %v257
    %v355 = vunpack.c.h.b16 %v257
    %v356 = vunpack.c.l.b16 %v258
    %v357 = vunpack.c.h.b16 %v258
    %v358 = vunpack.c.l.b16 %v259
    %v359 = vunpack.c.h.b16 %v259
    %v360 = vunpack.c.l.b16 %v260
    %v361 = vunpack.c.h.b16 %v260
    %v362 = vunpack.c.l.b16 %v261
    %v363 = vunpack.c.h.b16 %v261
    %v364 = vunpack.c.l.b16 %v262
    %v365 = vunpack.c.h.b16 %v262
    %v366 = vunpack.c.l.b16 %v263
    %v367 = vunpack.c.h.b16 %v263
    %v368 = vunpack.c.l.b16 %v264
    %v369 = vunpack.c.h.b16 %v264
    %v370 = vunpack.c.l.b16 %v265
    %v371 = vunpack.c.h.b16 %v265
    %v372 = vunpack.c.l.b16 %v266
    %v373 = vunpack.c.h.b16 %v266
    %v374 = vpack.c.b16 %v312, %v310
    %v375 = vpack.c.b16 %v313, %v311
    %v376 = vpack.c.b16 %v316, %v314
    %v377 = vpack.c.b16 %v317, %v315
    %v378 = vpack.c.b16 %v320, %v318
    %v379 = vpack.c.b16 %v321, %v319
    %v380 = vpack.c.b16 %v324, %v322
    %v381 = vpack.c.b16 %v325, %v323
    %v382 = vpack.c.b16 %v328, %v326
    %v383 = vpack.c.b16 %v329, %v327
    %v384 = vpack.c.b16 %v332, %v330
    %v385 = vpack.c.b16 %v333, %v331
    %v386 = vpack.c.b16 %v336, %v334
    %v387 = vpack.c.b16 %v337, %v335
    %v388 = vpack.c.b16 %v340, %v338
    %v389 = vpack.c.b16 %v341, %v339
    %v390 = vpack.c.b16 %v344, %v342
    %v391 = vpack.c.b16 %v345, %v343
    %v392 = vpack.c.b16 %v348, %v346
    %v393 = vpack.c.b16 %v349, %v347
    %v394 = vpack.c.b16 %v352, %v350
    %v395 = vpack.c.b16 %v353, %v351
    %v396 = vpack.c.b16 %v356, %v354
    %v397 = vpack.c.b16 %v357, %v355
    %v398 = vpack.c.b16 %v360, %v358
    %v399 = vpack.c.b16 %v361, %v359
    %v400 = vpack.c.b16 %v364, %v362
    %v401 = vpack.c.b16 %v365, %v363
    %v402 = vpack.c.b16 %v368, %v366
    %v403 = vpack.c.b16 %v369, %v367
    %v404 = vpack.c.b16 %v372, %v370
    %v405 = vpack.c.b16 %v373, %v371
    %438 = vmatprep.subr.bf16.mxu0 %v375
    %439 = vmatpush1.bf16.msra.mxu0 %v374
    %440 = vmatprep.subr.bf16.mxu0 %v377
    %441 = vmatpush1.bf16.msra.mxu0 %v376
    %442 = vmatprep.subr.bf16.mxu0 %v379
    %443 = vmatpush1.bf16.msra.mxu0 %v378
    %444 = vmatprep.subr.bf16.mxu0 %v381
    %445 = vmatpush1.bf16.msra.mxu0 %v380
    %446 = vmatprep.subr.bf16.mxu0 %v383
    %447 = vmatpush1.bf16.msra.mxu0 %v382
    %448 = vmatprep.subr.bf16.mxu0 %v385
    %449 = vmatpush1.bf16.msra.mxu0 %v384
    %450 = vmatprep.subr.bf16.mxu0 %v387
    %451 = vmatpush1.bf16.msra.mxu0 %v386
    %452 = vmatprep.subr.bf16.mxu0 %v389
    %453 = vmatpush1.bf16.msra.mxu0 %v388
    %454 = vmatprep.subr.bf16.mxu0 %v391
    %455 = vmatpush1.bf16.msra.mxu0 %v390
    %456 = vmatprep.subr.bf16.mxu0 %v393
    %457 = vmatpush1.bf16.msra.mxu0 %v392
    %458 = vmatprep.subr.bf16.mxu0 %v395
    %459 = vmatpush1.bf16.msra.mxu0 %v394
    %460 = vmatprep.subr.bf16.mxu0 %v397
    %461 = vmatpush1.bf16.msra.mxu0 %v396
    %462 = vmatprep.subr.bf16.mxu0 %v399
    %463 = vmatpush1.bf16.msra.mxu0 %v398
    %464 = vmatprep.subr.bf16.mxu0 %v401
    %465 = vmatpush1.bf16.msra.mxu0 %v400
    %466 = vmatprep.subr.bf16.mxu0 %v403
    %467 = vmatpush1.bf16.msra.mxu0 %v402
    %468 = vmatprep.subr.bf16.mxu0 %v405
    %469 = vmatpush1.bf16.msra.mxu0 %v404
    %470 = vmatprep.mubr.bf16.mxu0 %v234
    %471 = vmatmul.mubr.bf16.gmra.mrb[0].mxu0 %v233
    %v472 = vpop.f32.mrb[0].mxu0
    %v473 = vadd.f32 %v271, %v472
    %v474 = vpop.f32.mrb[0].mxu0
    %v475 = vadd.f32 %v275, %v474
    %v476 = vpop.f32.mrb[0].mxu0
    %v477 = vadd.f32 %v271, %v476
    %v478 = vpop.f32.mrb[0].mxu0
    %v479 = vadd.f32 %v275, %v478
    %480 = vdwg.mxu0
    %v481 = vpack.c.bf16 %v477, %v473
    %v482 = vpack.c.bf16 %v479, %v475
    %v483 = vxor.u32 %v481, 2147516416
    %v484 = vxor.u32 %v482, 2147516416
    %v486 = vmul.bf16 %v483, 1069105081
    %v487 = vpow.bf16.pop %v486
    %v489 = vmul.bf16 %v484, 1069105081
    %v490 = vpow.bf16.pop %v489
    %v491 = vadd.bf16 %v487, 1065369472
    %v492 = vadd.bf16 %v490, 1065369472
    %v493 = vrcp.bf16.pop %v491
    %v494 = vmul.bf16 1065369472, %v493
    %v495 = vrcp.bf16.pop %v492
    %v496 = vmul.bf16 1065369472, %v495
    %v497 = vmul.bf16 %v481, %v494
    %v498 = vmul.bf16 %v482, %v496
    %v499 = vld [vmem:[#allocation5 + $0x180] sm:$0xff]
    %v500 = vld [vmem:[#allocation5 + $0x188] sm:$0xff]
    %v501 = vld [vmem:[#allocation5 + $0x190] sm:$0xff]
    %v502 = vld [vmem:[#allocation5 + $0x198] sm:$0xff]
    %v503 = vld [vmem:[#allocation5 + $0x1a0] sm:$0xff]
    %v504 = vld [vmem:[#allocation5 + $0x1a8] sm:$0xff]
    %v505 = vld [vmem:[#allocation5 + $0x1b0] sm:$0xff]
    %v506 = vld [vmem:[#allocation5 + $0x1b8] sm:$0xff]
    %v507 = vld [vmem:[#allocation5 + $0x1c0] sm:$0xff]
    %v508 = vld [vmem:[#allocation5 + $0x1c8] sm:$0xff]
    %v509 = vld [vmem:[#allocation5 + $0x1d0] sm:$0xff]
    %v510 = vld [vmem:[#allocation5 + $0x1d8] sm:$0xff]
    %v511 = vld [vmem:[#allocation5 + $0x1e0] sm:$0xff]
    %v512 = vld [vmem:[#allocation5 + $0x1e8] sm:$0xff]
    %v513 = vld [vmem:[#allocation5 + $0x1f0] sm:$0xff]
    %v514 = vld [vmem:[#allocation5 + $0x1f8] sm:$0xff]
    %v515 = vld [vmem:[#allocation5 + $0x200] sm:$0xff]
    %v516 = vld [vmem:[#allocation5 + $0x208] sm:$0xff]
    %v517 = vld [vmem:[#allocation5 + $0x210] sm:$0xff]
    %v518 = vld [vmem:[#allocation5 + $0x218] sm:$0xff]
    %v519 = vld [vmem:[#allocation5 + $0x220] sm:$0xff]
    %v520 = vld [vmem:[#allocation5 + $0x228] sm:$0xff]
    %v521 = vld [vmem:[#allocation5 + $0x230] sm:$0xff]
    %v522 = vld [vmem:[#allocation5 + $0x238] sm:$0xff]
    %v523 = vld [vmem:[#allocation5 + $0x240] sm:$0xff]
    %v524 = vld [vmem:[#allocation5 + $0x248] sm:$0xff]
    %v525 = vld [vmem:[#allocation5 + $0x250] sm:$0xff]
    %v526 = vld [vmem:[#allocation5 + $0x258] sm:$0xff]
    %v527 = vld [vmem:[#allocation5 + $0x260] sm:$0xff]
    %v528 = vld [vmem:[#allocation5 + $0x268] sm:$0xff]
    %v529 = vld [vmem:[#allocation5 + $0x270] sm:$0xff]
    %v530 = vld [vmem:[#allocation5 + $0x278] sm:$0xff]
    %v532 = vlaneseq
    %v533 = vshrl.u32 %v532, 7
    %v534 = vsub.s32 0, %v533
    %v535 = vrot.slane %v65, %v534
    %v536 = vlaneseq
    %v537 = vshrl.u32 %v536, 7
    %v538 = vsub.s32 1, %v537
    %v539 = vrot.slane %v65, %v538
    %v574 = vunpack.c.l.b16 %v499
    %v575 = vunpack.c.h.b16 %v499
    %v576 = vunpack.c.l.b16 %v500
    %v577 = vunpack.c.h.b16 %v500
    %v578 = vunpack.c.l.b16 %v501
    %v579 = vunpack.c.h.b16 %v501
    %v580 = vunpack.c.l.b16 %v502
    %v581 = vunpack.c.h.b16 %v502
    %v582 = vunpack.c.l.b16 %v503
    %v583 = vunpack.c.h.b16 %v503
    %v584 = vunpack.c.l.b16 %v504
    %v585 = vunpack.c.h.b16 %v504
    %v586 = vunpack.c.l.b16 %v505
    %v587 = vunpack.c.h.b16 %v505
    %v588 = vunpack.c.l.b16 %v506
    %v589 = vunpack.c.h.b16 %v506
    %v590 = vunpack.c.l.b16 %v507
    %v591 = vunpack.c.h.b16 %v507
    %v592 = vunpack.c.l.b16 %v508
    %v593 = vunpack.c.h.b16 %v508
    %v594 = vunpack.c.l.b16 %v509
    %v595 = vunpack.c.h.b16 %v509
    %v596 = vunpack.c.l.b16 %v510
    %v597 = vunpack.c.h.b16 %v510
    %v598 = vunpack.c.l.b16 %v511
    %v599 = vunpack.c.h.b16 %v511
    %v600 = vunpack.c.l.b16 %v512
    %v601 = vunpack.c.h.b16 %v512
    %v602 = vunpack.c.l.b16 %v513
    %v603 = vunpack.c.h.b16 %v513
    %v604 = vunpack.c.l.b16 %v514
    %v605 = vunpack.c.h.b16 %v514
    %v606 = vunpack.c.l.b16 %v515
    %v607 = vunpack.c.h.b16 %v515
    %v608 = vunpack.c.l.b16 %v516
    %v609 = vunpack.c.h.b16 %v516
    %v610 = vunpack.c.l.b16 %v517
    %v611 = vunpack.c.h.b16 %v517
    %v612 = vunpack.c.l.b16 %v518
    %v613 = vunpack.c.h.b16 %v518
    %v614 = vunpack.c.l.b16 %v519
    %v615 = vunpack.c.h.b16 %v519
    %v616 = vunpack.c.l.b16 %v520
    %v617 = vunpack.c.h.b16 %v520
    %v618 = vunpack.c.l.b16 %v521
    %v619 = vunpack.c.h.b16 %v521
    %v620 = vunpack.c.l.b16 %v522
    %v621 = vunpack.c.h.b16 %v522
    %v622 = vunpack.c.l.b16 %v523
    %v623 = vunpack.c.h.b16 %v523
    %v624 = vunpack.c.l.b16 %v524
    %v625 = vunpack.c.h.b16 %v524
    %v626 = vunpack.c.l.b16 %v525
    %v627 = vunpack.c.h.b16 %v525
    %v628 = vunpack.c.l.b16 %v526
    %v629 = vunpack.c.h.b16 %v526
    %v630 = vunpack.c.l.b16 %v527
    %v631 = vunpack.c.h.b16 %v527
    %v632 = vunpack.c.l.b16 %v528
    %v633 = vunpack.c.h.b16 %v528
    %v634 = vunpack.c.l.b16 %v529
    %v635 = vunpack.c.h.b16 %v529
    %v636 = vunpack.c.l.b16 %v530
    %v637 = vunpack.c.h.b16 %v530
    %v638 = vpack.c.b16 %v576, %v574
    %v639 = vpack.c.b16 %v577, %v575
    %v640 = vpack.c.b16 %v580, %v578
    %v641 = vpack.c.b16 %v581, %v579
    %v642 = vpack.c.b16 %v584, %v582
    %v643 = vpack.c.b16 %v585, %v583
    %v644 = vpack.c.b16 %v588, %v586
    %v645 = vpack.c.b16 %v589, %v587
    %v646 = vpack.c.b16 %v592, %v590
    %v647 = vpack.c.b16 %v593, %v591
    %v648 = vpack.c.b16 %v596, %v594
    %v649 = vpack.c.b16 %v597, %v595
    %v650 = vpack.c.b16 %v600, %v598
    %v651 = vpack.c.b16 %v601, %v599
    %v652 = vpack.c.b16 %v604, %v602
    %v653 = vpack.c.b16 %v605, %v603
    %v654 = vpack.c.b16 %v608, %v606
    %v655 = vpack.c.b16 %v609, %v607
    %v656 = vpack.c.b16 %v612, %v610
    %v657 = vpack.c.b16 %v613, %v611
    %v658 = vpack.c.b16 %v616, %v614
    %v659 = vpack.c.b16 %v617, %v615
    %v660 = vpack.c.b16 %v620, %v618
    %v661 = vpack.c.b16 %v621, %v619
    %v662 = vpack.c.b16 %v624, %v622
    %v663 = vpack.c.b16 %v625, %v623
    %v664 = vpack.c.b16 %v628, %v626
    %v665 = vpack.c.b16 %v629, %v627
    %v666 = vpack.c.b16 %v632, %v630
    %v667 = vpack.c.b16 %v633, %v631
    %v668 = vpack.c.b16 %v636, %v634
    %v669 = vpack.c.b16 %v637, %v635
    %702 = vmatprep.subr.bf16.mxu0 %v639
    %703 = vmatpush1.bf16.msra.mxu0 %v638
    %704 = vmatprep.subr.bf16.mxu0 %v641
    %705 = vmatpush1.bf16.msra.mxu0 %v640
    %706 = vmatprep.subr.bf16.mxu0 %v643
    %707 = vmatpush1.bf16.msra.mxu0 %v642
    %708 = vmatprep.subr.bf16.mxu0 %v645
    %709 = vmatpush1.bf16.msra.mxu0 %v644
    %710 = vmatprep.subr.bf16.mxu0 %v647
    %711 = vmatpush1.bf16.msra.mxu0 %v646
    %712 = vmatprep.subr.bf16.mxu0 %v649
    %713 = vmatpush1.bf16.msra.mxu0 %v648
    %714 = vmatprep.subr.bf16.mxu0 %v651
    %715 = vmatpush1.bf16.msra.mxu0 %v650
    %716 = vmatprep.subr.bf16.mxu0 %v653
    %717 = vmatpush1.bf16.msra.mxu0 %v652
    %718 = vmatprep.subr.bf16.mxu0 %v655
    %719 = vmatpush1.bf16.msra.mxu0 %v654
    %720 = vmatprep.subr.bf16.mxu0 %v657
    %721 = vmatpush1.bf16.msra.mxu0 %v656
    %722 = vmatprep.subr.bf16.mxu0 %v659
    %723 = vmatpush1.bf16.msra.mxu0 %v658
    %724 = vmatprep.subr.bf16.mxu0 %v661
    %725 = vmatpush1.bf16.msra.mxu0 %v660
    %726 = vmatprep.subr.bf16.mxu0 %v663
    %727 = vmatpush1.bf16.msra.mxu0 %v662
    %728 = vmatprep.subr.bf16.mxu0 %v665
    %729 = vmatpush1.bf16.msra.mxu0 %v664
    %730 = vmatprep.subr.bf16.mxu0 %v667
    %731 = vmatpush1.bf16.msra.mxu0 %v666
    %732 = vmatprep.subr.bf16.mxu0 %v669
    %733 = vmatpush1.bf16.msra.mxu0 %v668
    %734 = vmatprep.mubr.bf16.mxu0 %v498
    %735 = vmatmul.mubr.bf16.gmra.mrb[0].mxu0 %v497
    %v736 = vpop.f32.mrb[0].mxu0
    %v737 = vadd.f32 %v535, %v736
    %v738 = vpop.f32.mrb[0].mxu0
    %v739 = vadd.f32 %v539, %v738
    %v740 = vpop.f32.mrb[0].mxu0
    %v741 = vadd.f32 %v535, %v740
    %v742 = vpop.f32.mrb[0].mxu0
    %v743 = vadd.f32 %v539, %v742
    %744 = vdwg.mxu0
    %v745 = vpack.c.bf16 %v741, %v737
    %v746 = vpack.c.bf16 %v743, %v739
    %v747 = vxor.u32 %v745, 2147516416
    %v748 = vxor.u32 %v746, 2147516416
    %v750 = vmul.bf16 %v747, 1069105081
    %v751 = vpow.bf16.pop %v750
    %v753 = vmul.bf16 %v748, 1069105081
    %v754 = vpow.bf16.pop %v753
    %v755 = vadd.bf16 %v751, 1065369472
    %v756 = vadd.bf16 %v754, 1065369472
    %v757 = vrcp.bf16.pop %v755
    %v758 = vmul.bf16 1065369472, %v757
    %v759 = vrcp.bf16.pop %v756
    %v760 = vmul.bf16 1065369472, %v759
    %v761 = vmul.bf16 %v745, %v758
    %v762 = vmul.bf16 %v746, %v760
    %v763 = vld [vmem:[#allocation5 + $0x280] sm:$0xf]
    %v764 = vld [vmem:[#allocation5 + $0x288] sm:$0xf]
    %v765 = vld [vmem:[#allocation5 + $0x290] sm:$0xf]
    %v766 = vld [vmem:[#allocation5 + $0x298] sm:$0xf]
    %v767 = vld [vmem:[#allocation5 + $0x2a0] sm:$0xf]
    %v768 = vld [vmem:[#allocation5 + $0x2a8] sm:$0xf]
    %v769 = vld [vmem:[#allocation5 + $0x2b0] sm:$0xf]
    %v770 = vld [vmem:[#allocation5 + $0x2b8] sm:$0xf]
    %v771 = vld [vmem:[#allocation5 + $0x2c0] sm:$0xf]
    %v772 = vld [vmem:[#allocation5 + $0x2c8] sm:$0xf]
    %v773 = vld [vmem:[#allocation5 + $0x2d0] sm:$0xf]
    %v774 = vld [vmem:[#allocation5 + $0x2d8] sm:$0xf]
    %v775 = vld [vmem:[#allocation5 + $0x2e0] sm:$0xf]
    %v776 = vld [vmem:[#allocation5 + $0x2e8] sm:$0xf]
    %v777 = vld [vmem:[#allocation5 + $0x2f0] sm:$0xf]
    %v778 = vld [vmem:[#allocation5 + $0x2f8] sm:$0xf]
    %v779 = vld [vmem:[#allocation5 + $0x300] sm:$0xf]
    %v780 = vld [vmem:[#allocation5 + $0x308] sm:$0xf]
    %v781 = vld [vmem:[#allocation5 + $0x310] sm:$0xf]
    %v782 = vld [vmem:[#allocation5 + $0x318] sm:$0xf]
    %v783 = vld [vmem:[#allocation5 + $0x320] sm:$0xf]
    %v784 = vld [vmem:[#allocation5 + $0x328] sm:$0xf]
    %v785 = vld [vmem:[#allocation5 + $0x330] sm:$0xf]
    %v786 = vld [vmem:[#allocation5 + $0x338] sm:$0xf]
    %v787 = vld [vmem:[#allocation5 + $0x340] sm:$0xf]
    %v788 = vld [vmem:[#allocation5 + $0x348] sm:$0xf]
    %v789 = vld [vmem:[#allocation5 + $0x350] sm:$0xf]
    %v790 = vld [vmem:[#allocation5 + $0x358] sm:$0xf]
    %v791 = vld [vmem:[#allocation5 + $0x360] sm:$0xf]
    %v792 = vld [vmem:[#allocation5 + $0x368] sm:$0xf]
    %v793 = vld [vmem:[#allocation5 + $0x370] sm:$0xf]
    %v794 = vld [vmem:[#allocation5 + $0x378] sm:$0xf]
    %v827 = vunpack.c.l.b16 %v763
    %v828 = vunpack.c.l.b16 %v764
    %v829 = vunpack.c.l.b16 %v765
    %v830 = vunpack.c.l.b16 %v766
    %v831 = vunpack.c.l.b16 %v767
    %v832 = vunpack.c.l.b16 %v768
    %v833 = vunpack.c.l.b16 %v769
    %v834 = vunpack.c.l.b16 %v770
    %v835 = vunpack.c.l.b16 %v771
    %v836 = vunpack.c.l.b16 %v772
    %v837 = vunpack.c.l.b16 %v773
    %v838 = vunpack.c.l.b16 %v774
    %v839 = vunpack.c.l.b16 %v775
    %v840 = vunpack.c.l.b16 %v776
    %v841 = vunpack.c.l.b16 %v777
    %v842 = vunpack.c.l.b16 %v778
    %v843 = vunpack.c.l.b16 %v779
    %v844 = vunpack.c.l.b16 %v780
    %v845 = vunpack.c.l.b16 %v781
    %v846 = vunpack.c.l.b16 %v782
    %v847 = vunpack.c.l.b16 %v783
    %v848 = vunpack.c.l.b16 %v784
    %v849 = vunpack.c.l.b16 %v785
    %v850 = vunpack.c.l.b16 %v786
    %v851 = vunpack.c.l.b16 %v787
    %v852 = vunpack.c.l.b16 %v788
    %v853 = vunpack.c.l.b16 %v789
    %v854 = vunpack.c.l.b16 %v790
    %v855 = vunpack.c.l.b16 %v791
    %v856 = vunpack.c.l.b16 %v792
    %v857 = vunpack.c.l.b16 %v793
    %v858 = vunpack.c.l.b16 %v794
    %v859 = vpack.c.b16 %v828, %v827
    %v860 = vpack.c.b16 %v830, %v829
    %v861 = vpack.c.b16 %v832, %v831
    %v862 = vpack.c.b16 %v834, %v833
    %v863 = vpack.c.b16 %v836, %v835
    %v864 = vpack.c.b16 %v838, %v837
    %v865 = vpack.c.b16 %v840, %v839
    %v866 = vpack.c.b16 %v842, %v841
    %v867 = vpack.c.b16 %v844, %v843
    %v868 = vpack.c.b16 %v846, %v845
    %v869 = vpack.c.b16 %v848, %v847
    %v870 = vpack.c.b16 %v850, %v849
    %v871 = vpack.c.b16 %v852, %v851
    %v872 = vpack.c.b16 %v854, %v853
    %v873 = vpack.c.b16 %v856, %v855
    %v874 = vpack.c.b16 %v858, %v857
    %891 = vmatprep.subr.bf16.mxu0 0
    %892 = vmatpush1.bf16.msra.mxu0 %v859
    %893 = vmatprep.subr.bf16.mxu0 0
    %894 = vmatpush1.bf16.msra.mxu0 %v860
    %895 = vmatprep.subr.bf16.mxu0 0
    %896 = vmatpush1.bf16.msra.mxu0 %v861
    %897 = vmatprep.subr.bf16.mxu0 0
    %898 = vmatpush1.bf16.msra.mxu0 %v862
    %899 = vmatprep.subr.bf16.mxu0 0
    %900 = vmatpush1.bf16.msra.mxu0 %v863
    %901 = vmatprep.subr.bf16.mxu0 0
    %902 = vmatpush1.bf16.msra.mxu0 %v864
    %903 = vmatprep.subr.bf16.mxu0 0
    %904 = vmatpush1.bf16.msra.mxu0 %v865
    %905 = vmatprep.subr.bf16.mxu0 0
    %906 = vmatpush1.bf16.msra.mxu0 %v866
    %907 = vmatprep.subr.bf16.mxu0 0
    %908 = vmatpush1.bf16.msra.mxu0 %v867
    %909 = vmatprep.subr.bf16.mxu0 0
    %910 = vmatpush1.bf16.msra.mxu0 %v868
    %911 = vmatprep.subr.bf16.mxu0 0
    %912 = vmatpush1.bf16.msra.mxu0 %v869
    %913 = vmatprep.subr.bf16.mxu0 0
    %914 = vmatpush1.bf16.msra.mxu0 %v870
    %915 = vmatprep.subr.bf16.mxu0 0
    %916 = vmatpush1.bf16.msra.mxu0 %v871
    %917 = vmatprep.subr.bf16.mxu0 0
    %918 = vmatpush1.bf16.msra.mxu0 %v872
    %919 = vmatprep.subr.bf16.mxu0 0
    %920 = vmatpush1.bf16.msra.mxu0 %v873
    %921 = vmatprep.subr.bf16.mxu0 0
    %922 = vmatpush1.bf16.msra.mxu0 %v874
    %923 = vmatprep.mubr.bf16.mxu0 %v762
    %924 = vmatmul.mubr.bf16.gmra.mrb[0].mxu0 %v761
    %v925 = vpop.f32.mrb[0].mxu0
    %v926 = vadd.f32 %v66, %v925
    %v927 = vpop.f32.mrb[0].mxu0
    %v928 = vpop.f32.mrb[0].mxu0
    %v929 = vadd.f32 %v66, %v928
    %v930 = vpop.f32.mrb[0].mxu0
    %931 = vdwg.mxu0
    %v932 = vld [vmem:[#allocation7 + $0x10] sm:$0xff]
    %v933 = vld [vmem:[#allocation7 + $0x20] sm:$0xff]
    %v934 = vld [vmem:[#allocation7 + $0x30] sm:$0xff]
    %v935 = vld [vmem:[#allocation7 + $0x40] sm:$0xff]
    %v936 = vld [vmem:[#allocation7 + $0x50] sm:$0xff]
    %v937 = vld [vmem:[#allocation7 + $0x60] sm:$0xff]
    %v938 = vld [vmem:[#allocation7 + $0x70] sm:$0xff]
    %v939 = vld [vmem:[#allocation7 + $0x80] sm:$0xff]
    %v940 = vld [vmem:[#allocation7 + $0x90] sm:$0xff]
    %v941 = vld [vmem:[#allocation7 + $0xa0] sm:$0xff]
    %v942 = vld [vmem:[#allocation7 + $0xb0] sm:$0xff]
    %v943 = vld [vmem:[#allocation7 + $0xc0] sm:$0xff]
    %v944 = vld [vmem:[#allocation7 + $0xd0] sm:$0xff]
    %v945 = vld [vmem:[#allocation7 + $0xe0] sm:$0xff]
    %v946 = vld [vmem:[#allocation7 + $0xf0] sm:$0xff]
    %v947 = vld [vmem:[#allocation7 + $0x100] sm:$0xff]
    %v948 = vld [vmem:[#allocation7 + $0x110] ss:$0 sm:$0xff]
    %949 = vmatprep.subr.mxu0 0.0
    %950 = vmatpush1.msra.mxu0 %v932
    %951 = vmatprep.subr.mxu0 0.0
    %952 = vmatpush1.msra.mxu0 %v933
    %953 = vmatprep.subr.mxu0 0.0
    %954 = vmatpush1.msra.mxu0 %v934
    %955 = vmatprep.subr.mxu0 0.0
    %956 = vmatpush1.msra.mxu0 %v935
    %957 = vmatprep.subr.mxu0 0.0
    %958 = vmatpush1.msra.mxu0 %v936
    %959 = vmatprep.subr.mxu0 0.0
    %960 = vmatpush1.msra.mxu0 %v937
    %961 = vmatprep.subr.mxu0 0.0
    %962 = vmatpush1.msra.mxu0 %v938
    %963 = vmatprep.subr.mxu0 0.0
    %964 = vmatpush1.msra.mxu0 %v939
    %965 = vmatprep.subr.mxu0 0.0
    %966 = vmatpush1.msra.mxu0 %v940
    %967 = vmatprep.subr.mxu0 0.0
    %968 = vmatpush1.msra.mxu0 %v941
    %969 = vmatprep.subr.mxu0 0.0
    %970 = vmatpush1.msra.mxu0 %v942
    %971 = vmatprep.subr.mxu0 0.0
    %972 = vmatpush1.msra.mxu0 %v943
    %973 = vmatprep.subr.mxu0 0.0
    %974 = vmatpush1.msra.mxu0 %v944
    %975 = vmatprep.subr.mxu0 0.0
    %976 = vmatpush1.msra.mxu0 %v945
    %977 = vmatprep.subr.mxu0 0.0
    %978 = vmatpush1.msra.mxu0 %v946
    %979 = vmatprep.subr.mxu0 0.0
    %980 = vmatpush1.msra.mxu0 %v947
    %981 = vmatprep.subr.mxu0 0.0
    %982 = vmatpush1.msra.mxu0 0.0
    %983 = vmatprep.subr.mxu0 0.0
    %984 = vmatpush1.msra.mxu0 0.0
    %985 = vmatprep.subr.mxu0 0.0
    %986 = vmatpush1.msra.mxu0 0.0
    %987 = vmatprep.subr.mxu0 0.0
    %988 = vmatpush1.msra.mxu0 0.0
    %989 = vmatprep.subr.mxu0 0.0
    %990 = vmatpush1.msra.mxu0 0.0
    %991 = vmatprep.subr.mxu0 0.0
    %992 = vmatpush1.msra.mxu0 0.0
    %993 = vmatprep.subr.mxu0 0.0
    %994 = vmatpush1.msra.mxu0 0.0
    %995 = vmatprep.subr.mxu0 0.0
    %996 = vmatpush1.msra.mxu0 0.0
    %997 = vmatprep.subr.mxu0 0.0
    %998 = vmatpush1.msra.mxu0 0.0
    %999 = vmatprep.subr.mxu0 0.0
    %1000 = vmatpush1.msra.mxu0 0.0
    %1001 = vmatprep.subr.mxu0 0.0
    %1002 = vmatpush1.msra.mxu0 0.0
    %1003 = vmatprep.subr.mxu0 0.0
    %1004 = vmatpush1.msra.mxu0 0.0
    %1005 = vmatprep.subr.mxu0 0.0
    %1006 = vmatpush1.msra.mxu0 0.0
    %1007 = vmatprep.subr.mxu0 0.0
    %1008 = vmatpush1.msra.mxu0 0.0
    %1009 = vmatprep.subr.mxu0 0.0
    %1010 = vmatpush1.msra.mxu0 0.0
    %1011 = vmatprep.subr.mxu0 0.0
    %1012 = vmatpush1.msra.mxu0 0.0
    %1013 = vmatprep.mubr.f32.mxu0 0.0
    %1014 = vmatmul.mubr.f32.gmra.mrb[0].mxu0 %v58
    %v1015 = vpop.f32.mrb[0].mxu0
    %v1016 = vadd.f32 %v948, %v1015
    %v1017 = vpop.f32.mrb[0].mxu0
    %1018 = vmatprep.mubr.f32.mxu0 0.0
    %1019 = vmatmul.mubr.f32.gmra.mrb[0].mxu0 %v59
    %v1020 = vpop.f32.mrb[0].mxu0
    %v1021 = vadd.f32 %v948, %v1020
    %v1022 = vpop.f32.mrb[0].mxu0
    %1023 = vdwg.mxu0
    %v1024 = vmul.f32 %v926, %v1016
    %v1025 = vmul.f32 %v929, %v1021
    %v1026 = vld [vmem:[#allocation7 + $0x120] sm:$0xff]
    %v1027 = vld [vmem:[#allocation7 + $0x130] sm:$0xff]
    %v1028 = vld [vmem:[#allocation7 + $0x140] sm:$0xff]
    %v1029 = vld [vmem:[#allocation7 + $0x150] sm:$0xff]
    %v1030 = vld [vmem:[#allocation7 + $0x160] sm:$0xff]
    %v1031 = vld [vmem:[#allocation7 + $0x170] sm:$0xff]
    %v1032 = vld [vmem:[#allocation7 + $0x180] sm:$0xff]
    %v1033 = vld [vmem:[#allocation7 + $0x190] sm:$0xff]
    %v1034 = vld [vmem:[#allocation7 + $0x1a0] sm:$0xff]
    %v1035 = vld [vmem:[#allocation7 + $0x1b0] sm:$0xff]
    %v1036 = vld [vmem:[#allocation7 + $0x1c0] sm:$0xff]
    %v1037 = vld [vmem:[#allocation7 + $0x1d0] sm:$0xff]
    %v1038 = vld [vmem:[#allocation7 + $0x1e0] sm:$0xff]
    %v1039 = vld [vmem:[#allocation7 + $0x1f0] sm:$0xff]
    %v1040 = vld [vmem:[#allocation7 + $0x200] sm:$0xff]
    %v1041 = vld [vmem:[#allocation7 + $0x210] sm:$0xff]
    %1042 = vmatprep.subr.mxu0 0.0
    %1043 = vmatpush1.msra.mxu0 %v1026
    %1044 = vmatprep.subr.mxu0 0.0
    %1045 = vmatpush1.msra.mxu0 %v1027
    %1046 = vmatprep.subr.mxu0 0.0
    %1047 = vmatpush1.msra.mxu0 %v1028
    %1048 = vmatprep.subr.mxu0 0.0
    %1049 = vmatpush1.msra.mxu0 %v1029
    %1050 = vmatprep.subr.mxu0 0.0
    %1051 = vmatpush1.msra.mxu0 %v1030
    %1052 = vmatprep.subr.mxu0 0.0
    %1053 = vmatpush1.msra.mxu0 %v1031
    %1054 = vmatprep.subr.mxu0 0.0
    %1055 = vmatpush1.msra.mxu0 %v1032
    %1056 = vmatprep.subr.mxu0 0.0
    %1057 = vmatpush1.msra.mxu0 %v1033
    %1058 = vmatprep.subr.mxu0 0.0
    %1059 = vmatpush1.msra.mxu0 %v1034
    %1060 = vmatprep.subr.mxu0 0.0
    %1061 = vmatpush1.msra.mxu0 %v1035
    %1062 = vmatprep.subr.mxu0 0.0
    %1063 = vmatpush1.msra.mxu0 %v1036
    %1064 = vmatprep.subr.mxu0 0.0
    %1065 = vmatpush1.msra.mxu0 %v1037
    %1066 = vmatprep.subr.mxu0 0.0
    %1067 = vmatpush1.msra.mxu0 %v1038
    %1068 = vmatprep.subr.mxu0 0.0
    %1069 = vmatpush1.msra.mxu0 %v1039
    %1070 = vmatprep.subr.mxu0 0.0
    %1071 = vmatpush1.msra.mxu0 %v1040
    %1072 = vmatprep.subr.mxu0 0.0
    %1073 = vmatpush1.msra.mxu0 %v1041
    %1074 = vmatprep.subr.mxu0 0.0
    %1075 = vmatpush1.msra.mxu0 0.0
    %1076 = vmatprep.subr.mxu0 0.0
    %1077 = vmatpush1.msra.mxu0 0.0
    %1078 = vmatprep.subr.mxu0 0.0
    %1079 = vmatpush1.msra.mxu0 0.0
    %1080 = vmatprep.subr.mxu0 0.0
    %1081 = vmatpush1.msra.mxu0 0.0
    %1082 = vmatprep.subr.mxu0 0.0
    %1083 = vmatpush1.msra.mxu0 0.0
    %1084 = vmatprep.subr.mxu0 0.0
    %1085 = vmatpush1.msra.mxu0 0.0
    %1086 = vmatprep.subr.mxu0 0.0
    %1087 = vmatpush1.msra.mxu0 0.0
    %1088 = vmatprep.subr.mxu0 0.0
    %1089 = vmatpush1.msra.mxu0 0.0
    %1090 = vmatprep.subr.mxu0 0.0
    %1091 = vmatpush1.msra.mxu0 0.0
    %1092 = vmatprep.subr.mxu0 0.0
    %1093 = vmatpush1.msra.mxu0 0.0
    %1094 = vmatprep.subr.mxu0 0.0
    %1095 = vmatpush1.msra.mxu0 0.0
    %1096 = vmatprep.subr.mxu0 0.0
    %1097 = vmatpush1.msra.mxu0 0.0
    %1098 = vmatprep.subr.mxu0 0.0
    %1099 = vmatpush1.msra.mxu0 0.0
    %1100 = vmatprep.subr.mxu0 0.0
    %1101 = vmatpush1.msra.mxu0 0.0
    %1102 = vmatprep.subr.mxu0 0.0
    %1103 = vmatpush1.msra.mxu0 0.0
    %1104 = vmatprep.subr.mxu0 0.0
    %1105 = vmatpush1.msra.mxu0 0.0
    %1106 = vmatprep.mubr.f32.mxu0 0.0
    %1107 = vmatmul.mubr.f32.gmra.mrb[0].mxu0 %v1024
    %v1108 = vpop.f32.mrb[0].mxu0
    %v1109 = vadd.f32 0.0, %v1108
    %v1110 = vpop.f32.mrb[0].mxu0
    %1111 = vmatprep.mubr.f32.mxu0 0.0
    %1112 = vmatmul.mubr.f32.gmra.mrb[0].mxu0 %v1025
    %v1113 = vpop.f32.mrb[0].mxu0
    %v1114 = vadd.f32 0.0, %v1113
    %v1115 = vpop.f32.mrb[0].mxu0
    %1116 = vdwg.mxu0
    %1117 = vst [vmem:[#allocation8] sm:$0xff] %v1109
    %1118 = vst [vmem:[#allocation8 + $0x8] sm:$0xff] %v1114
    // Predicated region
    $region26: #{tpu_custom_call.1} parent=1 // pred_check
      _
    $region27: #{tpu_custom_call.1} parent=1 // pred_check_branch
      %1120 = sbr.rel (0) target = $region29
    $region28: #{tpu_custom_call.1} parent=1 // pred_region
      %s1122 = ssub.s32 256, 256
      %1123 = vsyncadd [#allocation4], %s1122
      %s1124 = sshll.u32 [#allocation8], 4
      %s1125 = int_to_ptr.vmem [resolvable:$true] %s1124
      %1130 = dma.vmem_to_hbm [thread:$0]  %s1125, 256, %s3, [#allocation4], 128, 128, 8
    $region29: #{tpu_custom_call.1} parent=1 // pred_fallthru
      _
    // Predicated region
    $region30: #{tpu_custom_call.1} parent=1 // pred_check
      _
    $region31: #{tpu_custom_call.1} parent=1 // pred_check_branch
      %1132 = sbr.rel (0) target = $region33
    $region32: #{tpu_custom_call.1} parent=1 // pred_region
      %1133 = dma.done [#allocation4], 256
    $region33: #{tpu_custom_call.1} parent=1 // pred_fallthru
      _
    %1134 = vsyncpa [#allocation3], 1
    %1135 = vsyncpa [#allocation6], 1
    %1136 = vsyncpa [#allocation4], 1

</llo_original>
